<compile_context>
chip_gen: v7x
topology: tpu7x:2x2x1
jax: 0.10.0
libtpu: 0.0.40
codegen_flags: <defaults>
</compile_context>

<pallas_src>
from functools import partial

import jax
import jax.numpy as jnp
from jax.experimental import pallas as pl
from jax.experimental.pallas import tpu as pltpu


def mix_n_match_kernel(scal_ref, logits_ref, labels_ref, p_ref, logp_ref,
                       *, n_valid):
    i = pl.program_id(0)
    x = logits_ref[...]                               # (tile_n, C) f32
    tn, c = x.shape

    w0 = scal_ref[0]
    w1 = scal_ref[1]
    inv_t = scal_ref[2]                               # 1 / temperature
    u_term = scal_ref[3]                              # (1 - w0 - w1) / NUM_CLASS

    # Shared row max: max(x / t) == max(x) / t for t > 0, so one XLU reduce
    # and one (x - m) pass feed both softmaxes.
    m = jnp.max(x, axis=1, keepdims=True)
    xm = x - m
    e1 = jnp.exp(xm)                                  # softmax(x) numerator
    e0 = jnp.exp(xm * inv_t)                          # softmax(x / t) numerator
    s1 = jnp.sum(e1, axis=1, keepdims=True)
    s0 = jnp.sum(e0, axis=1, keepdims=True)

    # EUP approx reciprocal + one Newton refinement (rel. err ~1e-7); only N
    # values per tile, keeps the denominator off the VPU divide path.
    r1 = pl.reciprocal(s1, approx=True)
    r1 = r1 * (2.0 - s1 * r1)
    r0 = pl.reciprocal(s0, approx=True)
    r0 = r0 * (2.0 - s0 * r0)

    p = w0 * (e0 * r0) + w1 * (e1 * r1) + u_term      # (tile_n, C) f32
    p_ref[...] = p.astype(p_ref.dtype)

    # NLL: gather p[i, y_i] with a one-hot compare, log only the N picked
    # values (not the full N x C matrix).  Uses the f32 p regardless of the
    # emitted p dtype.
    col = jax.lax.broadcasted_iota(jnp.int32, (tn, c), 1)
    onehot = col == labels_ref[...]                   # (tn, C) bool
    picked = jnp.sum(jnp.where(onehot, p, 0.0), axis=1, keepdims=True)

    # Rows beyond n_valid only exist in the (partial) last tile; their writes
    # are dropped by Pallas, but mask them anyway so no garbage/NaN is ever
    # selected.  Guard f32 underflow of picked (reference is f64).
    row = i * tn + jax.lax.broadcasted_iota(jnp.int32, (tn, 1), 0)
    valid = row < n_valid
    safe = jnp.where(valid, jnp.maximum(picked, jnp.float32(1e-30)), 1.0)
    logp_ref[...] = jnp.log(safe)                     # 0 for out-of-range rows


def _round_up(v, m):
    return ((int(v) + m - 1) // m) * m


def _default_vmem_limit_bytes():
    # ~3/4 of physical VMEM, capped; fallback 48 MiB fits v5e/v6e/v7x.
    try:
        phys = pltpu.get_tpu_info().vmem_capacity_bytes
        return int(min(phys * 3 // 4, 112 << 20))
    except Exception:
        return 48 << 20


def mix_n_match_forward(logits, labels, w, temperature, num_class,
                        tile_n=None, p_dtype=jnp.float32,
                        vmem_limit_bytes=None):
    """logits: (N, C) float32, labels: (N,) int32. Returns (p, loss, True)."""
    n, c = logits.shape
    assert c == num_class
    if isinstance(temperature, (int, float)):
        # Shared-row-max trick (max(x/t) = max(x)/t) requires t > 0.
        assert temperature > 0, "temperature must be > 0"

    # Scalar prep hoisted out of the kernel
    # (module does self.w.data = self.w.clamp(0.1, 0.5)).
    w_c = jnp.clip(jnp.asarray(w, jnp.float32), 0.1, 0.5)
    inv_t = jnp.float32(1.0) / jnp.asarray(temperature, jnp.float32)
    u_term = (1.0 - w_c[0] - w_c[1]) / jnp.float32(num_class)
    scal = jnp.stack([w_c[0], w_c[1], inv_t, u_term]).astype(jnp.float32)

    # --- Tile sizing from a VMEM budget --------------------------------
    # A row occupies c_lanes = round_up(C, 128) lanes in vreg layout; the live
    # working set is ~10 tile-sized f32 buffers (2x double-buffered logits,
    # 2x p blocks, plus xm/e0/e1/p/one-hot temporaries) ~= 40 * tile_n * c_lanes B.
    c_lanes = _round_up(c, 128)
    if vmem_limit_bytes is None:
        vmem_limit_bytes = _default_vmem_limit_bytes()
    if tile_n is None:
        budget = vmem_limit_bytes // 2
        tile_n = max(8, min(1024, (budget // (40 * c_lanes)) // 8 * 8))
        if n > 8:
            # >= 2 tiles so both v7x TensorCores get work ("parallel" axis).
            tile_n = min(tile_n, max(8, _round_up((n + 1) // 2, 8)))
    tile_n = max(8, _round_up(tile_n, 8))
    tile_n = min(tile_n, _round_up(n, 8))
    num_tiles = pl.cdiv(n, tile_n)

    x = logits.astype(jnp.float32)
    labels2 = labels.astype(jnp.int32).reshape(n, 1)

    kernel = partial(mix_n_match_kernel, n_valid=n)

    p, logp_rows = pl.pallas_call(
        kernel,
        out_shape=(
            jax.ShapeDtypeStruct((n, c), p_dtype),           # p (exact shape)
            jax.ShapeDtypeStruct((n, 1), jnp.float32),       # log p[i, y_i]
        ),
        grid=(num_tiles,),
        in_specs=[
            pl.BlockSpec(memory_space=pltpu.SMEM),           # scalars (4,)
            pl.BlockSpec((tile_n, c), lambda i: (i, 0)),     # logits tile (full C)
            pl.BlockSpec((tile_n, 1), lambda i: (i, 0)),     # labels tile
        ],
        out_specs=(
            pl.BlockSpec((tile_n, c), lambda i: (i, 0)),     # p tile
            pl.BlockSpec((tile_n, 1), lambda i: (i, 0)),     # per-row log p[y]
        ),
        compiler_params=pltpu.CompilerParams(
            dimension_semantics=("parallel",),
            vmem_limit_bytes=int(vmem_limit_bytes)),
        cost_estimate=pl.CostEstimate(
            flops=12 * n * c,
            transcendentals=2 * n * c + 4 * n,
            bytes_accessed=4 * (2 * n * c + 3 * n) + 16),
    )(scal, x, labels2)

    loss = -jnp.sum(logp_rows) / jnp.float32(n)
    softmaxd = True
    return p, loss, softmaxd


def _reference(logits, labels, w, temperature, num_class):
    w = jnp.clip(w, 0.1, 0.5)
    p1 = jax.nn.softmax(logits, axis=1)
    p0 = jax.nn.softmax(logits / temperature, axis=1)
    p2 = jnp.ones_like(p0) / num_class
    p = w[0] * p0 + w[1] * p1 + (1.0 - w[0] - w[1]) * p2
    log_p = jnp.log(p)
    loss = -jnp.mean(log_p[jnp.arange(logits.shape[0]), labels])
    return p, loss


if __name__ == "__main__":
    key = jax.random.PRNGKey(0)
    k_logits, k_labels = jax.random.split(key)

    N, NUM_CLASS = 20, 10
    TEMPERATURE = 1.5   # TODO(synk): module reads this from temperature_scale/logging.json

    logits = jax.random.normal(k_logits, (N, NUM_CLASS), dtype=jnp.float32) * 3.0
    labels = jax.random.randint(k_labels, (N,), 0, NUM_CLASS, dtype=jnp.int32)

    # Deterministic parameter init, as in __init__: w = ones(2) * 0.333
    w = jnp.ones((2,), dtype=jnp.float32) * 0.333

    p_ref_v, loss_ref_v = _reference(logits, labels, w, TEMPERATURE, NUM_CLASS)

    # Small explicit tile so the example exercises the batch grid with a
    # partial last tile (3 tiles, rows 16..19 valid in the last one) and the
    # full-class-dim (non-128) block width.
    p, loss, softmaxd = mix_n_match_forward(logits, labels, w,
                                            TEMPERATURE, NUM_CLASS, tile_n=8)
    jax.block_until_ready((p, loss))
    assert p.shape == (N, NUM_CLASS)
    assert jnp.allclose(p, p_ref_v, atol=1e-5, rtol=1e-5), "p mismatch (tile_n=8)"
    assert jnp.allclose(loss, loss_ref_v, atol=1e-5, rtol=1e-5), "loss mismatch (tile_n=8)"
    assert softmaxd is True

    # Auto tile-sizing path (VMEM-budget heuristic + >=2 tiles for v7x).
    p2, loss2, _ = mix_n_match_forward(logits, labels, w, TEMPERATURE, NUM_CLASS)
    jax.block_until_ready((p2, loss2))
    assert jnp.allclose(p2, p_ref_v, atol=1e-5, rtol=1e-5), "p mismatch (auto tile)"
    assert jnp.allclose(loss2, loss_ref_v, atol=1e-5, rtol=1e-5), "loss mismatch (auto tile)"

    print("KERNEL_OK")
</pallas_src>

<mosaic_0001>
module attributes {stable_mosaic.version = 11 : i64} {
  func.func @mix_n_match_kernel(%arg0: i32, %arg1: memref<4xf32, #tpu.memory_space<smem>>, %arg2: memref<8x10xf32, #tpu.memory_space<vmem>>, %arg3: memref<8x1xi32, #tpu.memory_space<vmem>>, %arg4: memref<8x10xf32, #tpu.memory_space<vmem>>, %arg5: memref<8x1xf32, #tpu.memory_space<vmem>>) attributes {dimension_semantics = [#tpu.dimension_semantics<parallel>], iteration_bounds = array<i64: 3>, scalar_prefetch = 0 : i64, scratch_operands = 0 : i64, tpu.core_type = #tpu.core_type<tc>, window_params = [{transform_indices = @transform_0, window_bounds = array<i64: 4>}, {transform_indices = @transform_1, window_bounds = array<i64: 8, 10>}, {transform_indices = @transform_2, window_bounds = array<i64: 8, 1>}, {transform_indices = @transform_3, window_bounds = array<i64: 8, 10>}, {transform_indices = @transform_4, window_bounds = array<i64: 8, 1>}]} {
    %c0 = arith.constant 0 : index
    %c0_0 = arith.constant 0 : index
    %0 = vector.load %arg2[%c0, %c0_0] : memref<8x10xf32, #tpu.memory_space<vmem>>, vector<8x10xf32>
    %c0_1 = arith.constant 0 : index
    %1 = memref.load %arg1[%c0_1] : memref<4xf32, #tpu.memory_space<smem>>
    %c1 = arith.constant 1 : index
    %2 = memref.load %arg1[%c1] : memref<4xf32, #tpu.memory_space<smem>>
    %c2 = arith.constant 2 : index
    %3 = memref.load %arg1[%c2] : memref<4xf32, #tpu.memory_space<smem>>
    %c3 = arith.constant 3 : index
    %4 = memref.load %arg1[%c3] : memref<4xf32, #tpu.memory_space<smem>>
    %cst = arith.constant dense<0xFF800000> : vector<8xf32>
    %5 = vector.multi_reduction <maximumf>, %0, %cst [1] : vector<8x10xf32> to vector<8xf32>
    %6 = vector.shape_cast %5 : vector<8xf32> to vector<8x1xf32>
    %7 = vector.broadcast %6 : vector<8x1xf32> to vector<8x10xf32>
    %8 = arith.subf %0, %7 : vector<8x10xf32>
    %9 = math.exp %8 : vector<8x10xf32>
    %10 = vector.broadcast %3 : f32 to vector<8x10xf32>
    %11 = arith.mulf %8, %10 : vector<8x10xf32>
    %12 = math.exp %11 : vector<8x10xf32>
    %cst_2 = arith.constant dense<0.000000e+00> : vector<8xf32>
    %13 = vector.multi_reduction <add>, %9, %cst_2 [1] : vector<8x10xf32> to vector<8xf32>
    %14 = vector.shape_cast %13 : vector<8xf32> to vector<8x1xf32>
    %cst_3 = arith.constant dense<0.000000e+00> : vector<8xf32>
    %15 = vector.multi_reduction <add>, %12, %cst_3 [1] : vector<8x10xf32> to vector<8xf32>
    %16 = vector.shape_cast %15 : vector<8xf32> to vector<8x1xf32>
    %17 = tpu.reciprocal %14 {approx = true} : vector<8x1xf32> -> vector<8x1xf32>
    %18 = arith.mulf %14, %17 : vector<8x1xf32>
    %cst_4 = arith.constant 2.000000e+00 : f32
    %19 = vector.broadcast %cst_4 : f32 to vector<8x1xf32>
    %20 = arith.subf %19, %18 : vector<8x1xf32>
    %21 = arith.mulf %17, %20 : vector<8x1xf32>
    %22 = tpu.reciprocal %16 {approx = true} : vector<8x1xf32> -> vector<8x1xf32>
    %23 = arith.mulf %16, %22 : vector<8x1xf32>
    %cst_5 = arith.constant 2.000000e+00 : f32
    %24 = vector.broadcast %cst_5 : f32 to vector<8x1xf32>
    %25 = arith.subf %24, %23 : vector<8x1xf32>
    %26 = arith.mulf %22, %25 : vector<8x1xf32>
    %27 = vector.broadcast %26 : vector<8x1xf32> to vector<8x10xf32>
    %28 = arith.mulf %12, %27 : vector<8x10xf32>
    %29 = vector.broadcast %1 : f32 to vector<8x10xf32>
    %30 = arith.mulf %29, %28 : vector<8x10xf32>
    %31 = vector.broadcast %21 : vector<8x1xf32> to vector<8x10xf32>
    %32 = arith.mulf %9, %31 : vector<8x10xf32>
    %33 = vector.broadcast %2 : f32 to vector<8x10xf32>
    %34 = arith.mulf %33, %32 : vector<8x10xf32>
    %35 = arith.addf %30, %34 : vector<8x10xf32>
    %36 = vector.broadcast %4 : f32 to vector<8x10xf32>
    %37 = arith.addf %35, %36 : vector<8x10xf32>
    %c0_6 = arith.constant 0 : index
    %c0_7 = arith.constant 0 : index
    %38 = vector.load %arg4[%c0_6, %c0_7] : memref<8x10xf32, #tpu.memory_space<vmem>>, vector<8x10xf32>
    tpu.vector_store %arg4[%c0_6, %c0_7], %37 {strides = array<i32>} : memref<8x10xf32, #tpu.memory_space<vmem>>, vector<8x10xf32>,
    %39 = tpu.iota {dimensions = array<i32: 1>} : vector<8x10xi32>
    %c0_8 = arith.constant 0 : index
    %c0_9 = arith.constant 0 : index
    %40 = vector.load %arg3[%c0_8, %c0_9] : memref<8x1xi32, #tpu.memory_space<vmem>>, vector<8x1xi32>
    %41 = vector.broadcast %40 : vector<8x1xi32> to vector<8x10xi32>
    %42 = arith.cmpi eq, %39, %41 : vector<8x10xi32>
    %cst_10 = arith.constant 0.000000e+00 : f32
    %43 = vector.broadcast %cst_10 : f32 to vector<8x10xf32>
    %44 = arith.select %42, %37, %43 : vector<8x10xi1>, vector<8x10xf32>
    %cst_11 = arith.constant dense<0.000000e+00> : vector<8xf32>
    %45 = vector.multi_reduction <add>, %44, %cst_11 [1] : vector<8x10xf32> to vector<8xf32>
    %46 = vector.shape_cast %45 : vector<8xf32> to vector<8x1xf32>
    %c8_i32 = arith.constant 8 : i32
    %47 = arith.muli %arg0, %c8_i32 : i32
    %48 = tpu.iota {dimensions = array<i32: 0>} : vector<8x1xi32>
    %49 = vector.broadcast %47 : i32 to vector<8x1xi32>
    %50 = arith.addi %49, %48 : vector<8x1xi32>
    %c20_i32 = arith.constant 20 : i32
    %51 = vector.broadcast %c20_i32 : i32 to vector<8x1xi32>
    %52 = arith.cmpi slt, %50, %51 : vector<8x1xi32>
    %cst_12 = arith.constant 1.000000e-30 : f32
    %53 = vector.broadcast %cst_12 : f32 to vector<8x1xf32>
    %54 = arith.maximumf %46, %53 : vector<8x1xf32>
    %cst_13 = arith.constant 1.000000e+00 : f32
    %55 = vector.broadcast %cst_13 : f32 to vector<8x1xf32>
    %56 = arith.select %52, %54, %55 : vector<8x1xi1>, vector<8x1xf32>
    %57 = math.log %56 : vector<8x1xf32>
    %c0_14 = arith.constant 0 : index
    %c0_15 = arith.constant 0 : index
    %58 = vector.load %arg5[%c0_14, %c0_15] : memref<8x1xf32, #tpu.memory_space<vmem>>, vector<8x1xf32>
    tpu.vector_store %arg5[%c0_14, %c0_15], %57 {strides = array<i32>} : memref<8x1xf32, #tpu.memory_space<vmem>>, vector<8x1xf32>,
    return
  }
  func.func @transform_0(%arg0: i32) -> i32 {
    %c0_i32 = arith.constant 0 : i32
    %c0_i32_0 = arith.constant 0 : i32
    return %c0_i32 : i32
  }
  func.func @transform_1(%arg0: i32) -> (i32, i32) {
    %c0_i32 = arith.constant 0 : i32
    %c0_i32_0 = arith.constant 0 : i32
    return %arg0, %c0_i32 : i32, i32
  }
  func.func @transform_2(%arg0: i32) -> (i32, i32) {
    %c0_i32 = arith.constant 0 : i32
    %c0_i32_0 = arith.constant 0 : i32
    return %arg0, %c0_i32 : i32, i32
  }
  func.func @transform_3(%arg0: i32) -> (i32, i32) {
    %c0_i32 = arith.constant 0 : i32
    %c0_i32_0 = arith.constant 0 : i32
    return %arg0, %c0_i32 : i32, i32
  }
  func.func @transform_4(%arg0: i32) -> (i32, i32) {
    %c0_i32 = arith.constant 0 : i32
    %c0_i32_0 = arith.constant 0 : i32
    return %arg0, %c0_i32 : i32, i32
  }
}

</mosaic_0001>

<llo_original>
// kernel: tpu_custom_call.1
$region0: #{tpu_custom_call.1}
  #allocation0 [shape = 'u32[]', space=smem, size = 0x4, offset = 0x4, fixed_abs, tag = 'smem constant byte address 0x4 - core index']
  #allocation1 [shape = 'u32[144,128]{1,0:T(1,128)}', space=vmem, size = 0x12000, scoped, tag = 'internal scratch']
  %s0 = inlined_call_operand.vmem [shape: f32[4], index: 0, kind: input, shape index: {}]
  %s1 = inlined_call_operand.vmem [shape: f32[20,10], index: 1, kind: input, shape index: {}]
  %s2 = inlined_call_operand.vmem [shape: s32[20,1], index: 2, kind: input, shape index: {}]
  %s3 = inlined_call_operand.vmem [shape: f32[20,10], index: 3, kind: output, shape index: {0}]
  %s4 = inlined_call_operand.vmem [shape: f32[20,1], index: 4, kind: output, shape index: {1}]
  %5 = xla_tuple %s3, %s4
  %s6 = sld [smem:[#allocation0]]
  $region57: #{tpu_custom_call.1} parent=0
    _
  %s8 = ssub.s32 1, %s6
  %s9 = scalar_select 0, %s8, %s6
  $region1: #{tpu_custom_call.1} parent=0
    #allocation2 [shape = 'u8[512]{0}', space=smem, size = 0x200, scoped, tag = 'input window, operand 0, single buffered']
    #allocation3 [shape = 's32[2]{0}', space=sflag, size = 0x8, scoped, tag = 'scoped memory for tpu_custom_call.1']
    %10 = vsyncpa [#allocation3], 0
    loop: start=0, step=1, limit=5
    $region2: #{tpu_custom_call.1} parent=1 // loop_pre_header
      _
    $region3: #{tpu_custom_call.1} parent=1 // loop_header
      %s12 = sphi 0, %s16
      %p13 = scmp.ge.s32.totalorder %s12, 5
      %s20 = sphi 0, %s20
      %s22 = sphi 0, %s20
      %s23 = sphi 0, %s22
      %s37 = sphi 0, %s23
      %s43 = sphi 0, %s45
      %s46 = sphi 0, %s43
      %s47 = sphi 0, %s46
      %s63 = sphi 0, %s47
      %s69 = sphi 0, %s71
      %s72 = sphi 0, %s69
      %s73 = sphi 0, %s72
      %s89 = sphi 0, %s73
      %s95 = sphi 0, %s97
      %s98 = sphi 0, %s95
      %s99 = sphi 0, %s98
      %s115 = sphi 0, %s99
      %s121 = sphi 0, %s123
      %s124 = sphi 0, %s121
      %s125 = sphi 0, %s124
      %s141 = sphi 0, %s125
    $region4: #{tpu_custom_call.1} parent=1 // loop_header_branch
      %15 = sbr.rel (%p13) target = $region8
    $region5: #{tpu_custom_call.1} parent=1 // loop_body
      %s17 = ssub.s32 %s12, 1
      %s18 = ssub.s32 %s12, 2
      %s19 = sadd.s32 %s12, 1
      %s21 = sadd.s32 %s20, 1
      %p24 = scmp.eq.s32.totalorder %s12, 2
      %p25 = scmp.ne.s32.totalorder %s20, %s22
      %p26 = scmp.eq.s32.totalorder %s12, 0
      %p27 = por %p25, %p26
      %p28 = scmp.ne.s32.totalorder %s20, %s22
      %p29 = scmp.eq.s32.totalorder %s17, 2
      %p30 = por %p28, %p29
      %p31 = scmp.ne.s32.totalorder %s22, %s23
      %p32 = scmp.eq.s32.totalorder %s17, 0
      %p33 = por %p31, %p32
      %p34 = scmp.ne.s32.totalorder %s22, %s23
      %p35 = scmp.eq.s32.totalorder %s18, 2
      %p36 = por %p34, %p35
      %p38 = scmp.ne.s32.totalorder %s23, %s37
      %p39 = scmp.eq.s32.totalorder %s18, 0
      %p40 = por %p38, %p39
      %s41 = ssub.s32 %s12, %s19
      %p42 = scmp.eq.s32.totalorder %s41, 0
      %s44 = sadd.s32 %s43, 1
      %s45 = scalar_select %p42, %s43, %s44
      %p48 = pneg %p42
      %p49 = scmp.eq.s32.totalorder %s12, 2
      %p50 = por %p48, %p49
      %p51 = scmp.ne.s32.totalorder %s43, %s46
      %p52 = scmp.eq.s32.totalorder %s12, 0
      %p53 = por %p51, %p52
      %p54 = scmp.ne.s32.totalorder %s43, %s46
      %p55 = scmp.eq.s32.totalorder %s17, 2
      %p56 = por %p54, %p55
      %p57 = scmp.ne.s32.totalorder %s46, %s47
      %p58 = scmp.eq.s32.totalorder %s17, 0
      %p59 = por %p57, %p58
      %p60 = scmp.ne.s32.totalorder %s46, %s47
      %p61 = scmp.eq.s32.totalorder %s18, 2
      %p62 = por %p60, %p61
      %p64 = scmp.ne.s32.totalorder %s47, %s63
      %p65 = scmp.eq.s32.totalorder %s18, 0
      %p66 = por %p64, %p65
      %s67 = ssub.s32 %s12, %s19
      %p68 = scmp.eq.s32.totalorder %s67, 0
      %s70 = sadd.s32 %s69, 1
      %s71 = scalar_select %p68, %s69, %s70
      %p74 = pneg %p68
      %p75 = scmp.eq.s32.totalorder %s12, 2
      %p76 = por %p74, %p75
      %p77 = scmp.ne.s32.totalorder %s69, %s72
      %p78 = scmp.eq.s32.totalorder %s12, 0
      %p79 = por %p77, %p78
      %p80 = scmp.ne.s32.totalorder %s69, %s72
      %p81 = scmp.eq.s32.totalorder %s17, 2
      %p82 = por %p80, %p81
      %p83 = scmp.ne.s32.totalorder %s72, %s73
      %p84 = scmp.eq.s32.totalorder %s17, 0
      %p85 = por %p83, %p84
      %p86 = scmp.ne.s32.totalorder %s72, %s73
      %p87 = scmp.eq.s32.totalorder %s18, 2
      %p88 = por %p86, %p87
      %p90 = scmp.ne.s32.totalorder %s73, %s89
      %p91 = scmp.eq.s32.totalorder %s18, 0
      %p92 = por %p90, %p91
      %s93 = ssub.s32 %s12, %s19
      %p94 = scmp.eq.s32.totalorder %s93, 0
      %s96 = sadd.s32 %s95, 1
      %s97 = scalar_select %p94, %s95, %s96
      %p100 = pneg %p94
      %p101 = scmp.eq.s32.totalorder %s12, 2
      %p102 = por %p100, %p101
      %p103 = scmp.ne.s32.totalorder %s95, %s98
      %p104 = scmp.eq.s32.totalorder %s12, 0
      %p105 = por %p103, %p104
      %p106 = scmp.ne.s32.totalorder %s95, %s98
      %p107 = scmp.eq.s32.totalorder %s17, 2
      %p108 = por %p106, %p107
      %p109 = scmp.ne.s32.totalorder %s98, %s99
      %p110 = scmp.eq.s32.totalorder %s17, 0
      %p111 = por %p109, %p110
      %p112 = scmp.ne.s32.totalorder %s98, %s99
      %p113 = scmp.eq.s32.totalorder %s18, 2
      %p114 = por %p112, %p113
      %p116 = scmp.ne.s32.totalorder %s99, %s115
      %p117 = scmp.eq.s32.totalorder %s18, 0
      %p118 = por %p116, %p117
      %s119 = ssub.s32 %s12, %s19
      %p120 = scmp.eq.s32.totalorder %s119, 0
      %s122 = sadd.s32 %s121, 1
      %s123 = scalar_select %p120, %s121, %s122
      %p126 = pneg %p120
      %p127 = scmp.eq.s32.totalorder %s12, 2
      %p128 = por %p126, %p127
      %p129 = scmp.ne.s32.totalorder %s121, %s124
      %p130 = scmp.eq.s32.totalorder %s12, 0
      %p131 = por %p129, %p130
      %p132 = scmp.ne.s32.totalorder %s121, %s124
      %p133 = scmp.eq.s32.totalorder %s17, 2
      %p134 = por %p132, %p133
      %p135 = scmp.ne.s32.totalorder %s124, %s125
      %p136 = scmp.eq.s32.totalorder %s17, 0
      %p137 = por %p135, %p136
      %p138 = scmp.ne.s32.totalorder %s124, %s125
      %p139 = scmp.eq.s32.totalorder %s18, 2
      %p140 = por %p138, %p139
      %p142 = scmp.ne.s32.totalorder %s125, %s141
      %p143 = scmp.eq.s32.totalorder %s18, 0
      %p144 = por %p142, %p143
      %p145 = scmp.le.s32.totalorder 1, %s12
      %p146 = scmp.lt.s32.totalorder %s12, 4
      %p147 = pnand %p145, %p146
      %p148 = pneg %p147
      // Predicated region
      $region9: #{tpu_custom_call.1} parent=5 // pred_check
        _
      $region10: #{tpu_custom_call.1} parent=5 // pred_check_branch
        %150 = sbr.rel (%p147) target = $region12
      $region11: #{tpu_custom_call.1} parent=5 // pred_region
        %s151 = ssub.s32 %s12, 1
        // Predicated region
        $region13: #{tpu_custom_call.1} parent=11 // pred_check
          %p152 = pneg %p33
        $region14: #{tpu_custom_call.1} parent=11 // pred_check_branch
          %154 = sbr.rel (%p152) target = $region16
        $region15: #{tpu_custom_call.1} parent=11 // pred_region
          %s156 = ssub.s32 16, 16
          %157 = vsyncadd [#allocation3], %s156
          %s159 = sshll.u32 %s0, 4
          %s160 = int_to_ptr.vmem [resolvable:$true] %s159
          %162 = dma.vmem_to_smem %s160, 16, [#allocation2], [#allocation3]
        $region16: #{tpu_custom_call.1} parent=11 // pred_fallthru
          _
      $region12: #{tpu_custom_call.1} parent=5 // pred_fallthru
        _
      %p163 = scmp.lt.s32.totalorder %s12, 3
      // Predicated region
      $region17: #{tpu_custom_call.1} parent=5 // pred_check
        %p164 = pneg %p163
      $region18: #{tpu_custom_call.1} parent=5 // pred_check_branch
        %166 = sbr.rel (%p164) target = $region20
      $region19: #{tpu_custom_call.1} parent=5 // pred_region
        // Predicated region
        $region21: #{tpu_custom_call.1} parent=19 // pred_check
          %p167 = pneg %p53
        $region22: #{tpu_custom_call.1} parent=19 // pred_check_branch
          %169 = sbr.rel (%p167) target = $region24
        $region23: #{tpu_custom_call.1} parent=19 // pred_region
          %p170 = scmp.lt.s32.totalorder %s12, 2
          %s171 = scalar_select %p170, %s12, 2
          %s172 = smul.addr %s171, 8
          %s173 = scalar_lea.vmem %s1, %s172
        $region24: #{tpu_custom_call.1} parent=19 // pred_fallthru
          _
        // Predicated region
        $region25: #{tpu_custom_call.1} parent=19 // pred_check
          %p174 = pneg %p79
        $region26: #{tpu_custom_call.1} parent=19 // pred_check_branch
          %176 = sbr.rel (%p174) target = $region28
        $region27: #{tpu_custom_call.1} parent=19 // pred_region
          %p177 = scmp.lt.s32.totalorder %s12, 2
          %s178 = scalar_select %p177, %s12, 2
          %s179 = smul.addr %s178, 8
          %s180 = scalar_lea.vmem %s2, %s179
        $region28: #{tpu_custom_call.1} parent=19 // pred_fallthru
          _
      $region20: #{tpu_custom_call.1} parent=5 // pred_fallthru
        _
      %p181 = scmp.le.s32.totalorder 1, %s12
      %p182 = scmp.lt.s32.totalorder %s12, 4
      %p183 = pnand %p181, %p182
      %p184 = pneg %p183
      // Predicated region
      $region29: #{tpu_custom_call.1} parent=5 // pred_check
        _
      $region30: #{tpu_custom_call.1} parent=5 // pred_check_branch
        %186 = sbr.rel (%p183) target = $region32
      $region31: #{tpu_custom_call.1} parent=5 // pred_region
        %s187 = ssub.s32 %s12, 1
        // Predicated region
        $region33: #{tpu_custom_call.1} parent=31 // pred_check
          %p188 = pneg %p33
        $region34: #{tpu_custom_call.1} parent=31 // pred_check_branch
          %190 = sbr.rel (%p188) target = $region36
        $region35: #{tpu_custom_call.1} parent=31 // pred_region
          %191 = dma.done [#allocation3], 16
        $region36: #{tpu_custom_call.1} parent=31 // pred_fallthru
          _
        %192 = sfence
        %p193 = pneg %p33
        %p194 = pneg %p30
        %p195 = scmp.lt.s32.totalorder %s17, 2
        %s196 = scalar_select %p195, %s17, 2
        %s197 = smul.addr %s196, 8
        %s198 = scalar_lea.vmem %s1, %s197
        %p199 = pneg %p59
        %p200 = pneg %p56
        %p201 = scmp.lt.s32.totalorder %s17, 2
        %s202 = scalar_select %p201, %s17, 2
        %s203 = smul.addr %s202, 8
        %s204 = scalar_lea.vmem %s2, %s203
        %p205 = pneg %p85
        %p206 = pneg %p82
        %p207 = pneg %p111
        %p208 = pneg %p108
        %p209 = scmp.lt.s32.totalorder %s17, 2
        %s210 = scalar_select %p209, %s17, 2
        %s211 = smul.addr %s210, 8
        %s212 = scalar_lea.vmem %s3, %s211
        %p213 = pneg %p137
        %p214 = pneg %p134
        %p215 = scmp.lt.s32.totalorder %s17, 2
        %s216 = scalar_select %p215, %s17, 2
        %s217 = smul.addr %s216, 8
        %s218 = scalar_lea.vmem %s4, %s217
        %p219 = scmp.lt.s32.totalorder %s17, 2
        %s220 = scalar_select %p219, %s17, 2
        %s221 = smul.addr %s220, 8
        %s222 = scalar_lea.vmem %s1, %s221
        %p223 = scmp.lt.s32.totalorder %s17, 2
        %s224 = scalar_select %p223, %s17, 2
        %s225 = smul.addr %s224, 8
        %s226 = scalar_lea.vmem %s2, %s225
        %p227 = scmp.lt.s32.totalorder %s17, 2
        %s228 = scalar_select %p227, %s17, 2
        %s229 = smul.addr %s228, 8
        %s230 = scalar_lea.vmem %s3, %s229
        %p231 = scmp.lt.s32.totalorder %s17, 2
        %s232 = scalar_select %p231, %s17, 2
        %s233 = smul.addr %s232, 8
        %s234 = scalar_lea.vmem %s4, %s233
        %v235 = vld [vmem:[%s222] sm:$0xff]
        %s236 = sld [smem:[#allocation2]]
        %s237 = sld [smem:[#allocation2 + $0x1]]
        %s238 = sld [smem:[#allocation2 + $0x2]]
        %s239 = sld [smem:[#allocation2 + $0x3]]
        %vm240 = vcmask 80896
        %v241 = vsel %vm240, %v235, -inf
        %242 = vmax.xlane.f32.xlu0 %v241
        %v243 = vpop.xlane.xlu0 %242
        %v244 = vsub.f32 %v235, %v243
        %v245 = vmul.f32 %v244, 1.442695
        %v246 = vpow.pop %v245
        %v247 = vstv %s238
        %v248 = vmul.f32 %v244, %v247
        %v249 = vmul.f32 %v248, 1.442695
        %v250 = vpow.pop %v249
        %v251 = vsel %vm240, %v246, 0.0
        %252 = vadd.xlane.f32.xlu0 %v251
        %v253 = vpop.xlane.xlu0 %252
        %v254 = vsel %vm240, %v250, 0.0
        %255 = vadd.xlane.f32.xlu0 %v254
        %v256 = vpop.xlane.xlu0 %255
        %v257 = vrcp.pop %v253
        %v258 = vmul.f32 %v253, %v257
        %v259 = vsub.f32 2.0, %v258
        %v260 = vmul.f32 %v257, %v259
        %v261 = vrcp.pop %v256
        %v262 = vmul.f32 %v256, %v261
        %v263 = vsub.f32 2.0, %v262
        %v264 = vmul.f32 %v261, %v263
        %v265 = vmul.f32 %v250, %v264
        %v266 = vstv %s236
        %v267 = vmul.f32 %v266, %v265
        %v268 = vmul.f32 %v246, %v260
        %v269 = vstv %s237
        %v270 = vmul.f32 %v269, %v268
        %v271 = vadd.f32 %v267, %v270
        %v272 = vstv %s239
        %v273 = vadd.f32 %v271, %v272
        %274 = vst.msk [vmem:[%s230] sm:$0xff] %vm240, %v273
        %v275 = vlaneseq
        %v276 = vand.u32 %v275, 127
        %v277 = vld [vmem:[%s226] sm:$0xff]
        %278 = vset.pattern.permute.xlu0 0
        %279 = vperm.xlu0 %278, %v277
        %v280 = vpop.permute.xlu0 %279
        %vm281 = vcmp.eq.s32.totalorder %v276, %v280
        %v282 = vsel %vm281, %v273, 0.0
        %v283 = vsel %vm240, %v282, 0.0
        %284 = vadd.xlane.f32.xlu0 %v283
        %v285 = vpop.xlane.xlu0 %284
        %s286 = smul.u32 %s17, 8
        %v287 = vlaneseq
        %v288 = vshrl.u32 %v287, 7
        %v289 = vstv %s286
        %v290 = vadd.s32 %v289, %v288
        %vm291 = vcmp.lt.s32.totalorder %v290, 20
        %v292 = vmax.f32 %v285, 1e-30
        %v293 = vsel %vm291, %v292, 1.0
        %v294 = vlog2.pop %v293
        %v295 = vmul.f32 %v294, 0.6931472
        %vm296 = vcmask 7168
        %297 = vst.msk [vmem:[%s234] sm:$0xff] %vm296, %v295
        %p298 = scmp.lt.s32.totalorder %s17, 2
        %s299 = scalar_select %p298, %s17, 2
        %s300 = smul.addr %s299, 8
        %s301 = scalar_lea.vmem %s3, %s300
        %p302 = scmp.lt.s32.totalorder %s17, 2
        %s303 = scalar_select %p302, %s17, 2
        %s304 = smul.addr %s303, 8
        %s305 = scalar_lea.vmem %s4, %s304
        // Predicated region
        $region37: #{tpu_custom_call.1} parent=31 // pred_check
          %p306 = pneg %p108
        $region38: #{tpu_custom_call.1} parent=31 // pred_check_branch
          %308 = sbr.rel (%p306) target = $region40
        $region39: #{tpu_custom_call.1} parent=31 // pred_region
          _
        $region40: #{tpu_custom_call.1} parent=31 // pred_fallthru
          _
        // Predicated region
        $region41: #{tpu_custom_call.1} parent=31 // pred_check
          %p309 = pneg %p134
        $region42: #{tpu_custom_call.1} parent=31 // pred_check_branch
          %311 = sbr.rel (%p309) target = $region44
        $region43: #{tpu_custom_call.1} parent=31 // pred_region
          _
        $region44: #{tpu_custom_call.1} parent=31 // pred_fallthru
          _
      $region32: #{tpu_custom_call.1} parent=5 // pred_fallthru
        _
      %p312 = scmp.le.s32.totalorder 2, %s12
      // Predicated region
      $region45: #{tpu_custom_call.1} parent=5 // pred_check
        %p313 = pneg %p312
      $region46: #{tpu_custom_call.1} parent=5 // pred_check_branch
        %315 = sbr.rel (%p313) target = $region48
      $region47: #{tpu_custom_call.1} parent=5 // pred_region
        %s316 = ssub.s32 %s12, 2
        // Predicated region
        $region49: #{tpu_custom_call.1} parent=47 // pred_check
          %p317 = pneg %p114
        $region50: #{tpu_custom_call.1} parent=47 // pred_check_branch
          %319 = sbr.rel (%p317) target = $region52
        $region51: #{tpu_custom_call.1} parent=47 // pred_region
          %p320 = scmp.lt.s32.totalorder %s18, 2
          %s321 = scalar_select %p320, %s18, 2
          %s322 = smul.addr %s321, 8
          %s323 = scalar_lea.vmem %s3, %s322
        $region52: #{tpu_custom_call.1} parent=47 // pred_fallthru
          _
        // Predicated region
        $region53: #{tpu_custom_call.1} parent=47 // pred_check
          %p324 = pneg %p140
        $region54: #{tpu_custom_call.1} parent=47 // pred_check_branch
          %326 = sbr.rel (%p324) target = $region56
        $region55: #{tpu_custom_call.1} parent=47 // pred_region
          %p327 = scmp.lt.s32.totalorder %s18, 2
          %s328 = scalar_select %p327, %s18, 2
          %s329 = smul.addr %s328, 8
          %s330 = scalar_lea.vmem %s4, %s329
        $region56: #{tpu_custom_call.1} parent=47 // pred_fallthru
          _
      $region48: #{tpu_custom_call.1} parent=5 // pred_fallthru
        _
    $region6: #{tpu_custom_call.1} parent=1 // loop_footer
      %s16 = sadd.s32 1, %s12
    $region7: #{tpu_custom_call.1} parent=1 // loop_footer_branch
      %11 = sbr.rel target = $region3
    $region8: #{tpu_custom_call.1} parent=1 // loop_exit
      _
    %331 = vsyncpa [#allocation3], 1
    %s332 = scalar_lea.sflag [#allocation3], 1
    %333 = vsyncpa %s332, 1

</llo_original>
